<compile_context>
chip_gen: v7x
topology: tpu7x:2x2x1
jax: 0.10.0
libtpu: 0.0.40
codegen_flags: <defaults>
</compile_context>

<pallas_src>
import functools

import jax
import jax.numpy as jnp
from jax.experimental import pallas as pl
from jax.experimental.pallas import tpu as pltpu

_LANES = 128
_SUBLANES = 8
# 1024 * 128 * 4 B = 512 KiB per f32 input tile; 2 inputs x 2 buffers = 2 MiB.
_MAX_TILE_ROWS = 1024


def _round_up(a, b):
    return ((a + b - 1) // b) * b


def _quantile_loss_kernel(q_ref, x_ref, t_ref, *out_refs, use_square,
                          compute_tgt_sum):
    """Process one (tile_rows, 128) tile -> (8, 128) partial sums."""
    q = q_ref[0, 0]
    x = x_ref[...].astype(jnp.float32)
    t = t_ref[...].astype(jnp.float32)
    if use_square:
        x = x * x
    diff = x - t
    # q * max(-diff, 0) + (1 - q) * max(diff, 0)  ==  diff * where(diff<0, -q, 1-q)
    loss = diff * jnp.where(diff < 0.0, -q, 1.0 - q)

    rows, lanes = loss.shape
    groups = rows // _SUBLANES
    # Reduce the tile to one vreg-shaped (8, 128) partial (major-dim split is a
    # layout no-op; the reduction is plain VPU adds hidden under the DMA).
    out_refs[0][...] = jnp.sum(loss.reshape(groups, _SUBLANES, lanes), axis=0)
    if compute_tgt_sum:
        out_refs[1][...] = jnp.sum(t.reshape(groups, _SUBLANES, lanes), axis=0)


def quantile_loss(x, target, quantile, *, y_norm=True, size_average=True,
                  use_square=True):
    """Pallas TPU implementation of QauntileLoss.forward. x/target: any shape."""
    assert x.shape == target.shape
    n_elems = x.size

    flat_x = x.reshape(-1)
    flat_t = target.reshape(-1)

    rows = -(-n_elems // _LANES)
    tile_rows = min(_MAX_TILE_ROWS, _round_up(max(rows, 1), _SUBLANES))
    padded_rows = _round_up(max(rows, 1), tile_rows)
    num_tiles = padded_rows // tile_rows
    padded_n = padded_rows * _LANES

    if padded_n != n_elems:
        # Zero padding is exact: 0 loss and 0 target-sum contribution.
        flat_x = jnp.pad(flat_x, (0, padded_n - n_elems))
        flat_t = jnp.pad(flat_t, (0, padded_n - n_elems))

    # Keep caller dtype in HBM (no wrapper upcast); kernel casts to f32 per tile.
    x2d = flat_x.reshape(padded_rows, _LANES)
    t2d = flat_t.reshape(padded_rows, _LANES)
    q2d = jnp.asarray(quantile, dtype=jnp.float32).reshape(1, 1)

    part_shape = jax.ShapeDtypeStruct((num_tiles * _SUBLANES, _LANES), jnp.float32)
    part_spec = pl.BlockSpec((_SUBLANES, _LANES), lambda i: (i, 0))

    out_shapes = [part_shape]
    out_specs = [part_spec]
    if y_norm:
        out_shapes.append(part_shape)
        out_specs.append(part_spec)

    kernel = functools.partial(_quantile_loss_kernel,
                               use_square=use_square,
                               compute_tgt_sum=y_norm)

    outs = pl.pallas_call(
        kernel,
        out_shape=tuple(out_shapes),
        grid_spec=pltpu.PrefetchScalarGridSpec(
            num_scalar_prefetch=0,
            grid=(num_tiles,),
            in_specs=[
                pl.BlockSpec(memory_space=pltpu.SMEM),                 # quantile
                pl.BlockSpec((tile_rows, _LANES), lambda i: (i, 0)),   # input
                pl.BlockSpec((tile_rows, _LANES), lambda i: (i, 0)),   # target
            ],
            out_specs=tuple(out_specs),
        ),
        compiler_params=pltpu.CompilerParams(
            dimension_semantics=("parallel",),
        ),
    )(q2d, x2d, t2d)

    # Tiny scalar epilogue in plain JAX.
    loss_sum = jnp.sum(outs[0], dtype=jnp.float32)
    if y_norm:
        tgt_sum = jnp.sum(outs[1], dtype=jnp.float32)
        loss_sum = loss_sum / jnp.maximum(jnp.float32(1.0), tgt_sum)
    if size_average:
        return loss_sum / jnp.float32(n_elems)
    return loss_sum


def _reference(x, target, quantile, *, y_norm=True, size_average=True,
               use_square=True):
    x = x.astype(jnp.float32)
    target = target.astype(jnp.float32)
    if use_square:
        x = x ** 2
    diff = x - target
    loss = quantile * jnp.maximum(-diff, 0.0) + (1.0 - quantile) * jnp.maximum(diff, 0.0)
    if y_norm:
        loss = loss / jnp.maximum(1.0, target.sum())
    return loss.mean() if size_average else loss.sum()


if __name__ == "__main__":
    key = jax.random.PRNGKey(0)
    k1, k2, k3, k4 = jax.random.split(key, 4)

    # Primary: small NCHW prediction/target pair.
    x = jax.random.normal(k1, (2, 4, 16, 16), dtype=jnp.float32)
    target = jax.random.uniform(k2, (2, 4, 16, 16), dtype=jnp.float32)
    quantile = 0.7

    out = jax.block_until_ready(quantile_loss(x, target, quantile))
    ref = _reference(x, target, quantile)
    assert jnp.allclose(out, ref, rtol=1e-5, atol=1e-6), (out, ref)

    # Non-multiple-of-128 shape (exercises zero padding) + bf16 passthrough.
    xb = jax.random.normal(k3, (2, 3, 15, 17), dtype=jnp.bfloat16)
    tb = jax.random.uniform(k4, (2, 3, 15, 17), dtype=jnp.bfloat16)
    out2 = jax.block_until_ready(quantile_loss(xb, tb, 0.3))
    ref2 = _reference(xb, tb, 0.3)
    assert jnp.allclose(out2, ref2, rtol=1e-4, atol=1e-5), (out2, ref2)

    # y_norm=False / size_average=False variant (no target-sum output emitted).
    out3 = jax.block_until_ready(
        quantile_loss(x, target, 0.5, y_norm=False, size_average=False))
    ref3 = _reference(x, target, 0.5, y_norm=False, size_average=False)
    assert jnp.allclose(out3, ref3, rtol=1e-5, atol=1e-5), (out3, ref3)

    print("KERNEL_OK")
</pallas_src>

<mosaic_0001>
module attributes {stable_mosaic.version = 11 : i64} {
  func.func @_quantile_loss_kernel(%arg0: i32, %arg1: memref<1x1xf32, #tpu.memory_space<smem>>, %arg2: memref<16x128xf32, #tpu.memory_space<vmem>>, %arg3: memref<16x128xf32, #tpu.memory_space<vmem>>, %arg4: memref<8x128xf32, #tpu.memory_space<vmem>>, %arg5: memref<8x128xf32, #tpu.memory_space<vmem>>) attributes {dimension_semantics = [#tpu.dimension_semantics<parallel>], iteration_bounds = array<i64: 1>, scalar_prefetch = 0 : i64, scratch_operands = 0 : i64, tpu.core_type = #tpu.core_type<tc>, window_params = [{transform_indices = @transform_0, window_bounds = array<i64: 1, 1>}, {transform_indices = @transform_1, window_bounds = array<i64: 16, 128>}, {transform_indices = @transform_2, window_bounds = array<i64: 16, 128>}, {transform_indices = @transform_3, window_bounds = array<i64: 8, 128>}, {transform_indices = @transform_4, window_bounds = array<i64: 8, 128>}]} {
    %c0 = arith.constant 0 : index
    %c0_0 = arith.constant 0 : index
    %0 = memref.load %arg1[%c0, %c0_0] : memref<1x1xf32, #tpu.memory_space<smem>>
    %c0_1 = arith.constant 0 : index
    %c0_2 = arith.constant 0 : index
    %1 = vector.load %arg2[%c0_1, %c0_2] : memref<16x128xf32, #tpu.memory_space<vmem>>, vector<16x128xf32>
    %c0_3 = arith.constant 0 : index
    %c0_4 = arith.constant 0 : index
    %2 = vector.load %arg3[%c0_3, %c0_4] : memref<16x128xf32, #tpu.memory_space<vmem>>, vector<16x128xf32>
    %3 = arith.mulf %1, %1 : vector<16x128xf32>
    %4 = arith.subf %3, %2 : vector<16x128xf32>
    %cst = arith.constant 0.000000e+00 : f32
    %5 = vector.broadcast %cst : f32 to vector<16x128xf32>
    %6 = arith.cmpf olt, %4, %5 : vector<16x128xf32>
    %cst_5 = arith.constant 0.000000e+00 : f32
    %7 = arith.subf %cst_5, %0 : f32
    %cst_6 = arith.constant 1.000000e+00 : f32
    %8 = arith.subf %cst_6, %0 : f32
    %9 = vector.broadcast %7 : f32 to vector<16x128xf32>
    %10 = vector.broadcast %8 : f32 to vector<16x128xf32>
    %11 = arith.select %6, %9, %10 : vector<16x128xi1>, vector<16x128xf32>
    %12 = arith.mulf %4, %11 : vector<16x128xf32>
    %13 = vector.shape_cast %12 : vector<16x128xf32> to vector<2x8x128xf32>
    %cst_7 = arith.constant dense<0.000000e+00> : vector<8x128xf32>
    %14 = vector.multi_reduction <add>, %13, %cst_7 [0] : vector<2x8x128xf32> to vector<8x128xf32>
    %c0_8 = arith.constant 0 : index
    %c0_9 = arith.constant 0 : index
    %15 = vector.load %arg4[%c0_8, %c0_9] : memref<8x128xf32, #tpu.memory_space<vmem>>, vector<8x128xf32>
    tpu.vector_store %arg4[%c0_8, %c0_9], %14 {strides = array<i32>} : memref<8x128xf32, #tpu.memory_space<vmem>>, vector<8x128xf32>,
    %16 = vector.shape_cast %2 : vector<16x128xf32> to vector<2x8x128xf32>
    %cst_10 = arith.constant dense<0.000000e+00> : vector<8x128xf32>
    %17 = vector.multi_reduction <add>, %16, %cst_10 [0] : vector<2x8x128xf32> to vector<8x128xf32>
    %c0_11 = arith.constant 0 : index
    %c0_12 = arith.constant 0 : index
    %18 = vector.load %arg5[%c0_11, %c0_12] : memref<8x128xf32, #tpu.memory_space<vmem>>, vector<8x128xf32>
    tpu.vector_store %arg5[%c0_11, %c0_12], %17 {strides = array<i32>} : memref<8x128xf32, #tpu.memory_space<vmem>>, vector<8x128xf32>,
    return
  }
  func.func @transform_0(%arg0: i32) -> (i32, i32) {
    %c0_i32 = arith.constant 0 : i32
    %c0_i32_0 = arith.constant 0 : i32
    %c0_i32_1 = arith.constant 0 : i32
    return %c0_i32, %c0_i32_0 : i32, i32
  }
  func.func @transform_1(%arg0: i32) -> (i32, i32) {
    %c0_i32 = arith.constant 0 : i32
    %c0_i32_0 = arith.constant 0 : i32
    return %arg0, %c0_i32 : i32, i32
  }
  func.func @transform_2(%arg0: i32) -> (i32, i32) {
    %c0_i32 = arith.constant 0 : i32
    %c0_i32_0 = arith.constant 0 : i32
    return %arg0, %c0_i32 : i32, i32
  }
  func.func @transform_3(%arg0: i32) -> (i32, i32) {
    %c0_i32 = arith.constant 0 : i32
    %c0_i32_0 = arith.constant 0 : i32
    return %arg0, %c0_i32 : i32, i32
  }
  func.func @transform_4(%arg0: i32) -> (i32, i32) {
    %c0_i32 = arith.constant 0 : i32
    %c0_i32_0 = arith.constant 0 : i32
    return %arg0, %c0_i32 : i32, i32
  }
}

</mosaic_0001>

<llo_original>
// kernel: tpu_custom_call.1
$region0: #{tpu_custom_call.1}
  #allocation0 [shape = 'u32[]', space=smem, size = 0x4, offset = 0x4, fixed_abs, tag = 'smem constant byte address 0x4 - core index']
  #allocation1 [shape = 'u32[144,128]{1,0:T(1,128)}', space=vmem, size = 0x12000, scoped, tag = 'internal scratch']
  #allocation2 [shape = 'f32[1,1]{1,0:T(1,128)S(6)}', space=smem, size = 0x200, scoped, tag = 'scoped memory for tpu_custom_call.1']
  %s0 = inlined_call_operand.<no memory space> [shape: f32[1,1], index: 0, kind: input, shape index: {}]
  %s1 = inlined_call_operand.hbm [shape: f32[16,128], index: 1, kind: input, shape index: {}]
  %s2 = inlined_call_operand.hbm [shape: f32[16,128], index: 2, kind: input, shape index: {}]
  %s3 = inlined_call_operand.hbm [shape: f32[8,128], index: 3, kind: output, shape index: {0}]
  %s4 = inlined_call_operand.hbm [shape: f32[8,128], index: 4, kind: output, shape index: {1}]
  %5 = xla_tuple %s3, %s4
  %s6 = sld [smem:[#allocation0]]
  $region38: #{tpu_custom_call.1} parent=0
    _
  %s8 = ssub.s32 1, %s6
  %s9 = scalar_select 0, %s8, %s6
  %10 = sst [smem:[#allocation2]] %s0
  $region1: #{tpu_custom_call.1} parent=0
    #allocation3 [shape = 'u8[8192]{0}', space=vmem, size = 0x2000, scoped, tag = 'input window, operand 1, single buffered']
    #allocation4 [shape = 's32[1]{0}', space=sflag, size = 0x4, scoped, tag = 'scoped memory for tpu_custom_call.1']
    #allocation5 [shape = 's32[1]{0}', space=sflag, size = 0x4, scoped, tag = 'scoped memory for tpu_custom_call.1']
    #allocation6 [shape = 'u8[8192]{0}', space=vmem, size = 0x2000, scoped, tag = 'input window, operand 2, single buffered']
    #allocation7 [shape = 's32[1]{0}', space=sflag, size = 0x4, scoped, tag = 'scoped memory for tpu_custom_call.1']
    #allocation8 [shape = 'u8[4096]{0}', space=vmem, size = 0x1000, scoped, tag = 'output window, operand 0, single buffered']
    #allocation9 [shape = 'u8[4096]{0}', space=vmem, size = 0x1000, scoped, tag = 'output window, operand 1, single buffered']
    #allocation10 [shape = 's32[1]{0}', space=sflag, size = 0x4, scoped, tag = 'scoped memory for tpu_custom_call.1']
    %11 = vsyncpa [#allocation4], 0
    %12 = vsyncpa [#allocation7], 0
    %13 = vsyncpa [#allocation5], 0
    %14 = vsyncpa [#allocation10], 0
    // Predicated region
    $region2: #{tpu_custom_call.1} parent=1 // pred_check
      _
    $region3: #{tpu_custom_call.1} parent=1 // pred_check_branch
      %16 = sbr.rel (0) target = $region5
    $region4: #{tpu_custom_call.1} parent=1 // pred_region
      _
    $region5: #{tpu_custom_call.1} parent=1 // pred_fallthru
      _
    // Predicated region
    $region6: #{tpu_custom_call.1} parent=1 // pred_check
      _
    $region7: #{tpu_custom_call.1} parent=1 // pred_check_branch
      %18 = sbr.rel (0) target = $region9
    $region8: #{tpu_custom_call.1} parent=1 // pred_region
      %s20 = ssub.s32 256, 256
      %21 = vsyncadd [#allocation4], %s20
      %s22 = sshll.u32 [#allocation3], 4
      %s23 = int_to_ptr.vmem [resolvable:$true] %s22
      %28 = dma.hbm_to_vmem [thread:$0]  %s1, 256, %s23, [#allocation4], 128, 128, 8
    $region9: #{tpu_custom_call.1} parent=1 // pred_fallthru
      _
    // Predicated region
    $region10: #{tpu_custom_call.1} parent=1 // pred_check
      _
    $region11: #{tpu_custom_call.1} parent=1 // pred_check_branch
      %30 = sbr.rel (0) target = $region13
    $region12: #{tpu_custom_call.1} parent=1 // pred_region
      %s32 = ssub.s32 256, 256
      %33 = vsyncadd [#allocation7], %s32
      %s34 = sshll.u32 [#allocation6], 4
      %s35 = int_to_ptr.vmem [resolvable:$true] %s34
      %40 = dma.hbm_to_vmem [thread:$0]  %s2, 256, %s35, [#allocation7], 128, 128, 8
    $region13: #{tpu_custom_call.1} parent=1 // pred_fallthru
      _
    // Predicated region
    $region14: #{tpu_custom_call.1} parent=1 // pred_check
      _
    $region15: #{tpu_custom_call.1} parent=1 // pred_check_branch
      %42 = sbr.rel (0) target = $region17
    $region16: #{tpu_custom_call.1} parent=1 // pred_region
      %43 = dma.done [#allocation4], 256
    $region17: #{tpu_custom_call.1} parent=1 // pred_fallthru
      _
    // Predicated region
    $region18: #{tpu_custom_call.1} parent=1 // pred_check
      _
    $region19: #{tpu_custom_call.1} parent=1 // pred_check_branch
      %45 = sbr.rel (0) target = $region21
    $region20: #{tpu_custom_call.1} parent=1 // pred_region
      %46 = dma.done [#allocation7], 256
    $region21: #{tpu_custom_call.1} parent=1 // pred_fallthru
      _
    %s47 = sld [smem:[#allocation2]]
    %v48 = vld [vmem:[#allocation3] sm:$0xff]
    %v49 = vld [vmem:[#allocation3 + $0x8] sm:$0xff]
    %v50 = vld [vmem:[#allocation6] sm:$0xff]
    %v51 = vld [vmem:[#allocation6 + $0x8] sm:$0xff]
    %v52 = vmul.f32 %v48, %v48
    %v53 = vmul.f32 %v49, %v49
    %v54 = vsub.f32 %v52, %v50
    %v55 = vsub.f32 %v53, %v51
    %vm56 = vcmp.lt.f32.partialorder %v54, 0.0
    %vm57 = vcmp.lt.f32.partialorder %v55, 0.0
    %s58 = ssub.f32 0.0, %s47
    %s59 = ssub.f32 1.0, %s47
    %v60 = vstv %s58
    %v61 = vstv %s59
    %v62 = vsel %vm56, %v60, %v61
    %v63 = vsel %vm57, %v60, %v61
    %v64 = vmul.f32 %v54, %v62
    %v65 = vmul.f32 %v55, %v63
    %v66 = vadd.f32 %v64, %v65
    %67 = vst [vmem:[#allocation8] sm:$0xff] %v66
    %v68 = vadd.f32 %v50, %v51
    %69 = vst [vmem:[#allocation9] sm:$0xff] %v68
    // Predicated region
    $region22: #{tpu_custom_call.1} parent=1 // pred_check
      _
    $region23: #{tpu_custom_call.1} parent=1 // pred_check_branch
      %71 = sbr.rel (0) target = $region25
    $region24: #{tpu_custom_call.1} parent=1 // pred_region
      %s73 = ssub.s32 128, 128
      %74 = vsyncadd [#allocation5], %s73
      %s76 = sshll.u32 [#allocation8], 4
      %s77 = int_to_ptr.vmem [resolvable:$true] %s76
      %79 = dma.vmem_to_hbm [thread:$0]  %s77, 128, %s3, [#allocation5]
    $region25: #{tpu_custom_call.1} parent=1 // pred_fallthru
      _
    // Predicated region
    $region26: #{tpu_custom_call.1} parent=1 // pred_check
      _
    $region27: #{tpu_custom_call.1} parent=1 // pred_check_branch
      %81 = sbr.rel (0) target = $region29
    $region28: #{tpu_custom_call.1} parent=1 // pred_region
      %s83 = ssub.s32 128, 128
      %84 = vsyncadd [#allocation10], %s83
      %s86 = sshll.u32 [#allocation9], 4
      %s87 = int_to_ptr.vmem [resolvable:$true] %s86
      %89 = dma.vmem_to_hbm [thread:$0]  %s87, 128, %s4, [#allocation10]
    $region29: #{tpu_custom_call.1} parent=1 // pred_fallthru
      _
    // Predicated region
    $region30: #{tpu_custom_call.1} parent=1 // pred_check
      _
    $region31: #{tpu_custom_call.1} parent=1 // pred_check_branch
      %91 = sbr.rel (0) target = $region33
    $region32: #{tpu_custom_call.1} parent=1 // pred_region
      %92 = dma.done [#allocation5], 128
    $region33: #{tpu_custom_call.1} parent=1 // pred_fallthru
      _
    // Predicated region
    $region34: #{tpu_custom_call.1} parent=1 // pred_check
      _
    $region35: #{tpu_custom_call.1} parent=1 // pred_check_branch
      %94 = sbr.rel (0) target = $region37
    $region36: #{tpu_custom_call.1} parent=1 // pred_region
      %95 = dma.done [#allocation10], 128
    $region37: #{tpu_custom_call.1} parent=1 // pred_fallthru
      _
    %96 = vsyncpa [#allocation4], 1
    %97 = vsyncpa [#allocation7], 1
    %98 = vsyncpa [#allocation5], 1
    %99 = vsyncpa [#allocation10], 1

</llo_original>
